<compile_context>
chip_gen: v6e
topology: v6e:2x2x1
jax: 0.10.0
libtpu: 0.0.40
codegen_flags: <defaults>
</compile_context>

<pallas_src>
import functools

import jax
import jax.numpy as jnp
from jax.experimental import pallas as pl
from jax.experimental.pallas import tpu as pltpu


def _round_up(x, m):
    return (x + m - 1) // m * m


# ---------------------------------------------------------------------------
# Kernel 1: streaming mean-pool over the sequence axis.
# ---------------------------------------------------------------------------
def _mean_pool_kernel(x_ref, out_ref, *, inv_len):
    # x_ref: (TB, TL, C) bf16 block, sequence on sublanes, channels on lanes.
    # out_ref: (TB, C) f32, resident across the L ("arbitrary") grid axis.
    @pl.when(pl.program_id(1) == 0)
    def _():
        out_ref[...] = jnp.zeros_like(out_ref)

    # Sublane reduction over the sequence tile; accumulate in f32.
    out_ref[...] += jnp.sum(x_ref[...].astype(jnp.float32), axis=1)

    @pl.when(pl.program_id(1) == pl.num_programs(1) - 1)
    def _():
        out_ref[...] *= jnp.float32(inv_len)


def mean_pool(x_ncl, *, block_bytes=4 << 20):
    """Mean over the trailing (sequence) axis of a Conv1d-layout (B, C, L) array.

    Streams bf16 in (B, L, C) layout through a pipelined grid, returns (B, C) f32.
    """
    B, C, L = x_ncl.shape
    # Channel-major -> sequence-major: pooling becomes a cheap sublane reduce
    # and the surviving channel dim sits on lanes.  Stream the data as bf16.
    x = jnp.transpose(x_ncl, (0, 2, 1)).astype(jnp.bfloat16)

    # --- tile selection: biggest blocks within a per-buffer byte budget so that
    # double-buffered inputs fit comfortably under the smallest scoped-VMEM
    # default (16 MiB on v5e) and well under v7x's 64 MiB physical VMEM.
    tl_cap = max(8, min(2048, (block_bytes // max(1, 8 * C * 2)) // 8 * 8))
    tl = L if L <= tl_cap else tl_cap                     # tiled -> multiple of 8
    l_pad = _round_up(L, tl)
    bytes_per_row = tl * C * 2                            # bf16
    tb = max(8, min(512, (block_bytes // max(1, bytes_per_row)) // 8 * 8))
    tb = min(tb, _round_up(B, 8))
    b_pad = _round_up(B, tb)
    if (b_pad, l_pad) != (B, L):
        # Zero padding: padded L rows add 0 to the sum (we divide by true L);
        # padded batch rows are sliced away below.
        x = jnp.pad(x, ((0, b_pad - B), (0, l_pad - L), (0, 0)))

    out = pl.pallas_call(
        functools.partial(_mean_pool_kernel, inv_len=1.0 / L),
        out_shape=jax.ShapeDtypeStruct((b_pad, C), jnp.float32),
        grid_spec=pltpu.PrefetchScalarGridSpec(
            num_scalar_prefetch=0,
            grid=(b_pad // tb, l_pad // tl),
            in_specs=[pl.BlockSpec((tb, tl, C), lambda b, l: (b, l, 0))],
            out_specs=pl.BlockSpec((tb, C), lambda b, l: (b, 0)),
        ),
        compiler_params=pltpu.CompilerParams(
            dimension_semantics=("parallel", "arbitrary"),
            vmem_limit_bytes=32 * 1024 * 1024,
        ),
    )(x)
    return out[:B]


# ---------------------------------------------------------------------------
# Kernel 2: projection + normalization + InfoNCE cross-entropy (tiny).
# ---------------------------------------------------------------------------
def _infonce_loss_kernel(qm_ref, pnm_ref, wqt_ref, wpt_ref, out_ref, *,
                         num_pos, temperature):
    # qm_ref: (N, Cq) pooled query; pnm_ref: (N+M, Cp) pooled positive||negative
    # wqt_ref: (Cq, D); wpt_ref: (Cp, D); out_ref: (1, 1) scalar loss in SMEM.
    proj_q = jnp.dot(qm_ref[...], wqt_ref[...],
                     preferred_element_type=jnp.float32)          # (N, D)
    # Fused positive+negative projection: one weight push, one result drain.
    proj_pn = jnp.dot(pnm_ref[...], wpt_ref[...],
                      preferred_element_type=jnp.float32)         # (N+M, D)

    def l2norm(x):
        # F.normalize(dim=-1): x / max(||x||, 1e-12) == x * rsqrt(max(ss, 1e-24))
        ss = jnp.sum(x * x, axis=-1, keepdims=True)
        return x * jax.lax.rsqrt(jnp.maximum(ss, jnp.float32(1e-24)))

    # Fold 1/temperature into the normalized query once (scales both pos & neg
    # logits) instead of scaling the (N, M) logit matrix.
    qn = l2norm(proj_q) * jnp.float32(1.0 / temperature)
    pn_all = l2norm(proj_pn)
    pos_keys = pn_all[:num_pos]                                   # (N, D)
    neg_keys = pn_all[num_pos:]                                   # (M, D)

    pos_l = jnp.sum(qn * pos_keys, axis=-1, keepdims=True)        # (N, 1)
    # q @ negatives.T without an explicit transpose (contract last dims).
    neg_l = jax.lax.dot_general(qn, neg_keys, (((1,), (1,)), ((), ())),
                                preferred_element_type=jnp.float32)  # (N, M)

    # cross_entropy with labels == 0 (positive logit is class 0), max-stabilized.
    m = jnp.maximum(pos_l, jnp.max(neg_l, axis=-1, keepdims=True))
    lse = m + jnp.log(jnp.exp(pos_l - m) +
                      jnp.sum(jnp.exp(neg_l - m), axis=-1, keepdims=True))
    per_sample = lse - pos_l                                      # (N, 1)
    out_ref[0, 0] = jnp.sum(per_sample) * jnp.float32(1.0 / per_sample.shape[0])


# ---------------------------------------------------------------------------
# Wrapper reproducing the InfoNCE module forward (eval mode).
# ---------------------------------------------------------------------------
def infonce_loss(query, positive, negative, w_query, w_positive,
                 temperature=0.1):
    """query/positive: (N, Cq/Cp, L*); negative: (M, Cp, Ln); weights: (32, C)."""
    n = query.shape[0]

    q_mean = mean_pool(query)        # (N, Cq) f32
    p_mean = mean_pool(positive)     # (N, Cp) f32
    n_mean = mean_pool(negative)     # (M, Cp) f32
    # Tiny (N+M, Cp) concat so the positive/negative projection is one fused dot.
    pn_mean = jnp.concatenate([p_mean, n_mean], axis=0)

    kernel = functools.partial(_infonce_loss_kernel, num_pos=n,
                               temperature=temperature)
    out = pl.pallas_call(
        kernel,
        out_shape=jax.ShapeDtypeStruct((1, 1), jnp.float32),
        in_specs=[pl.BlockSpec(memory_space=pltpu.MemorySpace.VMEM)] * 4,
        out_specs=pl.BlockSpec(memory_space=pltpu.MemorySpace.SMEM),
    )(q_mean, pn_mean,
      w_query.T.astype(jnp.float32), w_positive.T.astype(jnp.float32))
    return out[0, 0]


def infonce_reference(query, positive, negative, w_query, w_positive,
                      temperature=0.1):
    """Pure-JAX reference mirroring the PyTorch forward (eval mode), in f32."""
    f32 = jnp.float32
    q, p, ne = query.astype(f32), positive.astype(f32), negative.astype(f32)
    wq, wp = w_query.astype(f32), w_positive.astype(f32)
    proj_q = jnp.mean(jnp.einsum('dc,ncl->ndl', wq, q), axis=-1)
    proj_p = jnp.mean(jnp.einsum('dc,ncl->ndl', wp, p), axis=-1)
    proj_n = jnp.mean(jnp.einsum('dc,mcl->mdl', wp, ne), axis=-1)
    norm = lambda x: x / jnp.maximum(
        jnp.linalg.norm(x, axis=-1, keepdims=True), 1e-12)
    qn, pn, nn = norm(proj_q), norm(proj_p), norm(proj_n)
    pos = jnp.sum(qn * pn, axis=-1, keepdims=True)
    neg = qn @ nn.T
    logits = jnp.concatenate([pos, neg], axis=1) / temperature
    return jnp.mean(jax.nn.logsumexp(logits, axis=-1) - logits[:, 0])


if __name__ == "__main__":
    key = jax.random.PRNGKey(0)
    k1, k2, k3, k4, k5 = jax.random.split(key, 5)

    # Module config: orig_d_l = orig_d_av = 16 (!= 32, so both 1x1 conv
    # projections are exercised), d_l = d_av = 32. Different sequence lengths
    # per stream are mean-pooled away.
    N, M = 6, 8            # batch, num negatives
    Cq, Cp = 16, 16        # orig_d_l, orig_d_av (conv in-channels)
    Lq, Lp, Ln = 24, 16, 40
    D = 32

    query = jax.random.normal(k1, (N, Cq, Lq), jnp.float32)
    positive = jax.random.normal(k2, (N, Cp, Lp), jnp.float32)
    negative = jax.random.normal(k3, (M, Cp, Ln), jnp.float32)
    # deterministic synthetic conv1d(k=1, bias=False) weights, shape (out, in)
    w_query = jax.random.normal(k4, (D, Cq), jnp.float32) / jnp.sqrt(Cq)
    w_positive = jax.random.normal(k5, (D, Cp), jnp.float32) / jnp.sqrt(Cp)

    # Inputs are streamed to the kernel in bf16; quantize once so the f32
    # reference sees exactly the same values (apples-to-apples comparison).
    query_b = query.astype(jnp.bfloat16)
    positive_b = positive.astype(jnp.bfloat16)
    negative_b = negative.astype(jnp.bfloat16)

    loss = infonce_loss(query_b, positive_b, negative_b, w_query, w_positive,
                        temperature=0.1)
    jax.block_until_ready(loss)

    ref = infonce_reference(query_b, positive_b, negative_b, w_query,
                            w_positive, temperature=0.1)
    assert jnp.allclose(loss, ref, rtol=1e-4, atol=1e-5), (loss, ref)

    print("KERNEL_OK")
</pallas_src>

<mosaic_0001>
module attributes {stable_mosaic.version = 11 : i64} {
  func.func @_mean_pool_kernel(%arg0: i32, %arg1: i32, %arg2: memref<8x24x16xbf16, #tpu.memory_space<vmem>>, %arg3: memref<8x16xf32, #tpu.memory_space<vmem>>) attributes {dimension_semantics = [#tpu.dimension_semantics<parallel>, #tpu.dimension_semantics<arbitrary>], iteration_bounds = array<i64: 1, 1>, scalar_prefetch = 0 : i64, scratch_operands = 0 : i64, tpu.core_type = #tpu.core_type<tc>, window_params = [{transform_indices = @transform_0, window_bounds = array<i64: 8, 24, 16>}, {transform_indices = @transform_1, window_bounds = array<i64: 8, 16>}]} {
    %c0_i32 = arith.constant 0 : i32
    %0 = arith.cmpi eq, %arg1, %c0_i32 : i32
    %1 = arith.extui %0 : i1 to i32
    %c0_i32_0 = arith.constant 0 : i32
    %2 = arith.cmpi ne, %1, %c0_i32_0 : i32
    scf.if %2 {
      %cst_9 = arith.constant 0.000000e+00 : f32
      %12 = vector.broadcast %cst_9 : f32 to vector<8x16xf32>
      %c0_10 = arith.constant 0 : index
      %c0_11 = arith.constant 0 : index
      %13 = vector.load %arg3[%c0_10, %c0_11] : memref<8x16xf32, #tpu.memory_space<vmem>>, vector<8x16xf32>
      tpu.vector_store %arg3[%c0_10, %c0_11], %12 {strides = array<i32>} : memref<8x16xf32, #tpu.memory_space<vmem>>, vector<8x16xf32>,
    } else {
    }
    %c0 = arith.constant 0 : index
    %c0_1 = arith.constant 0 : index
    %3 = vector.load %arg3[%c0, %c0_1] : memref<8x16xf32, #tpu.memory_space<vmem>>, vector<8x16xf32>
    %c0_2 = arith.constant 0 : index
    %c0_3 = arith.constant 0 : index
    %c0_4 = arith.constant 0 : index
    %4 = vector.load %arg2[%c0_2, %c0_3, %c0_4] : memref<8x24x16xbf16, #tpu.memory_space<vmem>>, vector<8x24x16xbf16>
    %5 = arith.extf %4 : vector<8x24x16xbf16> to vector<8x24x16xf32>
    %cst = arith.constant dense<0.000000e+00> : vector<8x16xf32>
    %6 = vector.multi_reduction <add>, %5, %cst [1] : vector<8x24x16xf32> to vector<8x16xf32>
    %7 = arith.addf %3, %6 : vector<8x16xf32>
    %c0_5 = arith.constant 0 : index
    %c0_6 = arith.constant 0 : index
    %8 = vector.load %arg3[%c0_5, %c0_6] : memref<8x16xf32, #tpu.memory_space<vmem>>, vector<8x16xf32>
    tpu.vector_store %arg3[%c0_5, %c0_6], %7 {strides = array<i32>} : memref<8x16xf32, #tpu.memory_space<vmem>>, vector<8x16xf32>,
    %c0_i32_7 = arith.constant 0 : i32
    %9 = arith.cmpi eq, %arg1, %c0_i32_7 : i32
    %10 = arith.extui %9 : i1 to i32
    %c0_i32_8 = arith.constant 0 : i32
    %11 = arith.cmpi ne, %10, %c0_i32_8 : i32
    scf.if %11 {
      %c0_9 = arith.constant 0 : index
      %c0_10 = arith.constant 0 : index
      %12 = vector.load %arg3[%c0_9, %c0_10] : memref<8x16xf32, #tpu.memory_space<vmem>>, vector<8x16xf32>
      %cst_11 = arith.constant 0.0416666679 : f32
      %13 = vector.broadcast %cst_11 : f32 to vector<8x16xf32>
      %14 = arith.mulf %12, %13 : vector<8x16xf32>
      %c0_12 = arith.constant 0 : index
      %c0_13 = arith.constant 0 : index
      %15 = vector.load %arg3[%c0_12, %c0_13] : memref<8x16xf32, #tpu.memory_space<vmem>>, vector<8x16xf32>
      tpu.vector_store %arg3[%c0_12, %c0_13], %14 {strides = array<i32>} : memref<8x16xf32, #tpu.memory_space<vmem>>, vector<8x16xf32>,
    } else {
    }
    return
  }
  func.func @transform_0(%arg0: i32, %arg1: i32) -> (i32, i32, i32) {
    %c0_i32 = arith.constant 0 : i32
    %c0_i32_0 = arith.constant 0 : i32
    return %arg0, %arg1, %c0_i32 : i32, i32, i32
  }
  func.func @transform_1(%arg0: i32, %arg1: i32) -> (i32, i32) {
    %c0_i32 = arith.constant 0 : i32
    %c0_i32_0 = arith.constant 0 : i32
    return %arg0, %c0_i32 : i32, i32
  }
}

</mosaic_0001>

<llo_original>
// kernel: tpu_custom_call.1
$region0: #{tpu_custom_call.1}
  #allocation0 [shape = 'u32[]', space=smem, size = 0x4, offset = 0x4, fixed_abs, tag = 'smem constant byte address 0x4 - core index']
  #allocation1 [shape = 'u32[144,128]{1,0:T(1,128)}', space=vmem, size = 0x12000, scoped, tag = 'internal scratch']
  %s0 = inlined_call_operand.vmem [shape: bf16[8,24,16], index: 0, kind: input, shape index: {}]
  %s1 = inlined_call_operand.hbm [shape: f32[8,16], index: 1, kind: output, shape index: {}]
  %s2 = sld [smem:[#allocation0]]
  $region22: #{tpu_custom_call.1} parent=0
    _
  %s4 = ssub.s32 1, %s2
  %s5 = scalar_select 0, %s4, %s2
  $region1: #{tpu_custom_call.1} parent=0
    #allocation2 [shape = 'u8[4096]{0}', space=vmem, size = 0x1000, scoped, tag = 'output window, operand 0, single buffered']
    #allocation3 [shape = 's32[1]{0}', space=sflag, size = 0x4, scoped, tag = 'scoped memory for tpu_custom_call.1']
    %6 = vsyncpa [#allocation3], 0
    // Predicated region
    $region2: #{tpu_custom_call.1} parent=1 // pred_check
      _
    $region3: #{tpu_custom_call.1} parent=1 // pred_check_branch
      %8 = sbr.rel (0) target = $region5
    $region4: #{tpu_custom_call.1} parent=1 // pred_region
      _
    $region5: #{tpu_custom_call.1} parent=1 // pred_fallthru
      _
    %p9 = scmp.eq.s32.totalorder 0, 0
    // Predicated region
    $region6: #{tpu_custom_call.1} parent=1 // pred_check
      %p10 = pneg %p9
    $region7: #{tpu_custom_call.1} parent=1 // pred_check_branch
      %12 = sbr.rel (%p10) target = $region9
    $region8: #{tpu_custom_call.1} parent=1 // pred_region
      %vm13 = vcmask 130048
      %14 = vst.msk [vmem:[#allocation2] sm:$0xff] %vm13, 0.0
    $region9: #{tpu_custom_call.1} parent=1 // pred_fallthru
      _
    %v15 = vld [vmem:[#allocation2] sm:$0xff]
    %v16 = vld [vmem:[%s0] sm:$0xf]
    %v17 = vld [vmem:[%s0 + $0x4] sm:$0xf]
    %v18 = vld [vmem:[%s0 + $0x8] sm:$0xf]
    %v19 = vld [vmem:[%s0 + $0xc] sm:$0xf]
    %v20 = vld [vmem:[%s0 + $0x10] sm:$0xf]
    %v21 = vld [vmem:[%s0 + $0x14] sm:$0xf]
    %v22 = vld [vmem:[%s0 + $0x18] sm:$0xf]
    %v23 = vld [vmem:[%s0 + $0x1c] sm:$0xf]
    %v24 = vld [vmem:[%s0 + $0x20] sm:$0xf]
    %v25 = vld [vmem:[%s0 + $0x24] sm:$0xf]
    %v26 = vld [vmem:[%s0 + $0x28] sm:$0xf]
    %v27 = vld [vmem:[%s0 + $0x2c] sm:$0xf]
    %v28 = vld [vmem:[%s0 + $0x30] sm:$0xf]
    %v29 = vld [vmem:[%s0 + $0x34] sm:$0xf]
    %v30 = vld [vmem:[%s0 + $0x38] sm:$0xf]
    %v31 = vld [vmem:[%s0 + $0x3c] sm:$0xf]
    %v32 = vld [vmem:[%s0 + $0x40] sm:$0xf]
    %v33 = vld [vmem:[%s0 + $0x44] sm:$0xf]
    %v34 = vld [vmem:[%s0 + $0x48] sm:$0xf]
    %v35 = vld [vmem:[%s0 + $0x4c] sm:$0xf]
    %v36 = vld [vmem:[%s0 + $0x50] sm:$0xf]
    %v37 = vld [vmem:[%s0 + $0x54] sm:$0xf]
    %v38 = vld [vmem:[%s0 + $0x58] sm:$0xf]
    %v39 = vld [vmem:[%s0 + $0x5c] sm:$0xf]
    %v40 = vunpack.c.l.bf16 %v16
    %v41 = vunpack.c.l.bf16 %v17
    %v42 = vunpack.c.l.bf16 %v18
    %v43 = vunpack.c.l.bf16 %v19
    %v44 = vunpack.c.l.bf16 %v20
    %v45 = vunpack.c.l.bf16 %v21
    %v46 = vunpack.c.l.bf16 %v22
    %v47 = vunpack.c.l.bf16 %v23
    %v48 = vunpack.c.l.bf16 %v24
    %v49 = vunpack.c.l.bf16 %v25
    %v50 = vunpack.c.l.bf16 %v26
    %v51 = vunpack.c.l.bf16 %v27
    %v52 = vunpack.c.l.bf16 %v28
    %v53 = vunpack.c.l.bf16 %v29
    %v54 = vunpack.c.l.bf16 %v30
    %v55 = vunpack.c.l.bf16 %v31
    %v56 = vunpack.c.l.bf16 %v32
    %v57 = vunpack.c.l.bf16 %v33
    %v58 = vunpack.c.l.bf16 %v34
    %v59 = vunpack.c.l.bf16 %v35
    %v60 = vunpack.c.l.bf16 %v36
    %v61 = vunpack.c.l.bf16 %v37
    %v62 = vunpack.c.l.bf16 %v38
    %v63 = vunpack.c.l.bf16 %v39
    %vm64 = vcmask 130048
    %v65 = vsel %vm64, %v40, 0.0
    %v66 = vsel %vm64, %v41, 0.0
    %v67 = vadd.f32 %v65, %v66
    %v68 = vsel %vm64, %v42, 0.0
    %v69 = vadd.f32 %v67, %v68
    %v70 = vrot.slane %v69, 4
    %v71 = vadd.f32 %v69, %v70
    %v72 = vrot.slane %v71, 2
    %v73 = vadd.f32 %v71, %v72
    %v74 = vrot.slane %v73, 1
    %v75 = vadd.f32 %v73, %v74
    %v76 = vsel %vm64, %v43, 0.0
    %v77 = vsel %vm64, %v44, 0.0
    %v78 = vadd.f32 %v76, %v77
    %v79 = vsel %vm64, %v45, 0.0
    %v80 = vadd.f32 %v78, %v79
    %v81 = vrot.slane %v80, 4
    %v82 = vadd.f32 %v80, %v81
    %v83 = vrot.slane %v82, 2
    %v84 = vadd.f32 %v82, %v83
    %v85 = vrot.slane %v84, 1
    %v86 = vadd.f32 %v84, %v85
    %v87 = vsel %vm64, %v46, 0.0
    %v88 = vsel %vm64, %v47, 0.0
    %v89 = vadd.f32 %v87, %v88
    %v90 = vsel %vm64, %v48, 0.0
    %v91 = vadd.f32 %v89, %v90
    %v92 = vrot.slane %v91, 4
    %v93 = vadd.f32 %v91, %v92
    %v94 = vrot.slane %v93, 2
    %v95 = vadd.f32 %v93, %v94
    %v96 = vrot.slane %v95, 1
    %v97 = vadd.f32 %v95, %v96
    %v98 = vsel %vm64, %v49, 0.0
    %v99 = vsel %vm64, %v50, 0.0
    %v100 = vadd.f32 %v98, %v99
    %v101 = vsel %vm64, %v51, 0.0
    %v102 = vadd.f32 %v100, %v101
    %v103 = vrot.slane %v102, 4
    %v104 = vadd.f32 %v102, %v103
    %v105 = vrot.slane %v104, 2
    %v106 = vadd.f32 %v104, %v105
    %v107 = vrot.slane %v106, 1
    %v108 = vadd.f32 %v106, %v107
    %v109 = vsel %vm64, %v52, 0.0
    %v110 = vsel %vm64, %v53, 0.0
    %v111 = vadd.f32 %v109, %v110
    %v112 = vsel %vm64, %v54, 0.0
    %v113 = vadd.f32 %v111, %v112
    %v114 = vrot.slane %v113, 4
    %v115 = vadd.f32 %v113, %v114
    %v116 = vrot.slane %v115, 2
    %v117 = vadd.f32 %v115, %v116
    %v118 = vrot.slane %v117, 1
    %v119 = vadd.f32 %v117, %v118
    %v120 = vsel %vm64, %v55, 0.0
    %v121 = vsel %vm64, %v56, 0.0
    %v122 = vadd.f32 %v120, %v121
    %v123 = vsel %vm64, %v57, 0.0
    %v124 = vadd.f32 %v122, %v123
    %v125 = vrot.slane %v124, 4
    %v126 = vadd.f32 %v124, %v125
    %v127 = vrot.slane %v126, 2
    %v128 = vadd.f32 %v126, %v127
    %v129 = vrot.slane %v128, 1
    %v130 = vadd.f32 %v128, %v129
    %v131 = vsel %vm64, %v58, 0.0
    %v132 = vsel %vm64, %v59, 0.0
    %v133 = vadd.f32 %v131, %v132
    %v134 = vsel %vm64, %v60, 0.0
    %v135 = vadd.f32 %v133, %v134
    %v136 = vrot.slane %v135, 4
    %v137 = vadd.f32 %v135, %v136
    %v138 = vrot.slane %v137, 2
    %v139 = vadd.f32 %v137, %v138
    %v140 = vrot.slane %v139, 1
    %v141 = vadd.f32 %v139, %v140
    %v142 = vsel %vm64, %v61, 0.0
    %v143 = vsel %vm64, %v62, 0.0
    %v144 = vadd.f32 %v142, %v143
    %v145 = vsel %vm64, %v63, 0.0
    %v146 = vadd.f32 %v144, %v145
    %v147 = vrot.slane %v146, 4
    %v148 = vadd.f32 %v146, %v147
    %v149 = vrot.slane %v148, 2
    %v150 = vadd.f32 %v148, %v149
    %v151 = vrot.slane %v150, 1
    %v152 = vadd.f32 %v150, %v151
    %vm161 = vcmask 1041409
    %v162 = vsel %vm161, %v86, %v75
    %vm163 = vcmask 1042434
    %v164 = vsel %vm163, %v97, %v162
    %vm165 = vcmask 1043459
    %v166 = vsel %vm165, %v108, %v164
    %vm167 = vcmask 1044484
    %v168 = vsel %vm167, %v119, %v166
    %vm169 = vcmask 1045509
    %v170 = vsel %vm169, %v130, %v168
    %vm171 = vcmask 1046534
    %v172 = vsel %vm171, %v141, %v170
    %vm173 = vcmask 1047559
    %v174 = vsel %vm173, %v152, %v172
    %v176 = vadd.f32 %v15, %v174
    %177 = vst.msk [vmem:[#allocation2] sm:$0xff] %vm64, %v176
    // Predicated region
    $region10: #{tpu_custom_call.1} parent=1 // pred_check
      %p178 = pneg %p9
    $region11: #{tpu_custom_call.1} parent=1 // pred_check_branch
      %180 = sbr.rel (%p178) target = $region13
    $region12: #{tpu_custom_call.1} parent=1 // pred_region
      %v181 = vld [vmem:[#allocation2] sm:$0xff]
      %v182 = vmul.f32 %v181, 0.041666668
      %183 = vst.msk [vmem:[#allocation2] sm:$0xff] %vm64, %v182
    $region13: #{tpu_custom_call.1} parent=1 // pred_fallthru
      _
    // Predicated region
    $region14: #{tpu_custom_call.1} parent=1 // pred_check
      _
    $region15: #{tpu_custom_call.1} parent=1 // pred_check_branch
      %185 = sbr.rel (0) target = $region17
    $region16: #{tpu_custom_call.1} parent=1 // pred_region
      %s187 = ssub.s32 128, 128
      %188 = vsyncadd [#allocation3], %s187
      %s190 = sshll.u32 [#allocation2], 4
      %s191 = int_to_ptr.vmem [resolvable:$true] %s190
      %193 = dma.vmem_to_hbm [thread:$0]  %s191, 128, %s1, [#allocation3]
    $region17: #{tpu_custom_call.1} parent=1 // pred_fallthru
      _
    // Predicated region
    $region18: #{tpu_custom_call.1} parent=1 // pred_check
      _
    $region19: #{tpu_custom_call.1} parent=1 // pred_check_branch
      %195 = sbr.rel (0) target = $region21
    $region20: #{tpu_custom_call.1} parent=1 // pred_region
      %196 = dma.done [#allocation3], 128
    $region21: #{tpu_custom_call.1} parent=1 // pred_fallthru
      _
    %197 = vsyncpa [#allocation3], 1

</llo_original>
